<compile_context>
chip_gen: v7x
topology: tpu7x:2x2x1
jax: 0.10.0
libtpu: 0.0.40
codegen_flags: <defaults>
</compile_context>

<pallas_src>
import jax
import jax.numpy as jnp
from jax.experimental import pallas as pl
from jax.experimental.pallas import tpu as pltpu


def _round_up(a: int, b: int) -> int:
    return ((a + b - 1) // b) * b


def _choose_tile(rows: int, *, max_rows: int = 2048) -> int:
    """Row-tile size: balanced, >=2 steps when possible, <= max_rows."""
    if rows <= 16:
        return rows  # single tiny block == full extent (no (8,128) constraint)
    n_steps = max(2, pl.cdiv(rows, max_rows))          # v7x: shard across 2 TCs
    return min(max_rows, _round_up(pl.cdiv(rows, n_steps), 16))


def _make_kernel(compute_dtype):
    def kernel(x_ref, w_ref, b_ref, o_ref):
        # bf16 operands -> single-pass MXU; f32 accumulation.
        x = x_ref[...].astype(compute_dtype)
        y = jnp.dot(x, w_ref[...], preferred_element_type=jnp.float32)
        y = y + b_ref[...]                              # (tm, N) + (1, N), f32
        o_ref[...] = jnp.maximum(y, 0.0).astype(o_ref.dtype)
    return kernel


def make_segment_projection(weight, bias, *, num_segments, window_length,
                            compute_dtype=jnp.bfloat16):
    """Returns a jitted callable x -> (-1, num_segments, hidden_dim)."""
    hidden_dim = int(weight.shape[0])
    W = window_length

    # Segments packed per row for a lane-dense K = P*W = 128.
    if (128 % W == 0) and (W <= 128) and (num_segments % (128 // W) == 0):
        P = 128 // W
    else:
        # TODO(synk): P=1 fallback is correct but loses lane-dense layout
        # (masked vst when hidden_dim < 128).
        P = 1
    K = P * W
    N = P * hidden_dim

    # --- packed parameters, built once (hoisted out of the per-call path) ---
    wT = jnp.asarray(weight).astype(compute_dtype).T            # (W, H)
    if P > 1:
        eye = jnp.eye(P, dtype=compute_dtype)
        w_blk = jnp.einsum("pq,wh->pwqh", eye, wT).reshape(K, N)  # block-diag
    else:
        w_blk = wT
    b_blk = jnp.tile(jnp.asarray(bias, jnp.float32).reshape(1, hidden_dim),
                     (1, P))                                     # (1, N), f32

    kernel = _make_kernel(compute_dtype)

    @jax.jit
    def apply(x):
        dtype = x.dtype
        # P consecutive segments per packed row; contiguous reshape (no copy,
        # no padding) since P divides num_segments.
        xp = x.reshape(-1, K)                                    # (Mp, K)
        Mp = xp.shape[0]
        tm = _choose_tile(Mp)

        out = pl.pallas_call(
            kernel,
            out_shape=jax.ShapeDtypeStruct((Mp, N), dtype),
            grid_spec=pltpu.PrefetchScalarGridSpec(
                num_scalar_prefetch=0,
                grid=(pl.cdiv(Mp, tm),),
                in_specs=[
                    pl.BlockSpec((tm, K), lambda i: (i, 0)),     # packed X rows
                    pl.BlockSpec((K, N), lambda i: (0, 0)),      # weight (invariant)
                    pl.BlockSpec((1, N), lambda i: (0, 0)),      # bias (invariant)
                ],
                out_specs=pl.BlockSpec((tm, N), lambda i: (i, 0)),
            ),
            compiler_params=pltpu.CompilerParams(
                dimension_semantics=("parallel",),               # megacore on v7x
            ),
        )(xp, w_blk, b_blk)

        # (Mp, P*H) -> (M, H) -> (-1, S, H): contiguous reshape, no slicing.
        return out.reshape(-1, num_segments, hidden_dim)

    return apply


if __name__ == "__main__":
    # Small, deterministic configuration.
    num_segments = 8
    window_length = 32
    hidden_dim = 64
    batch = 4

    key = jax.random.PRNGKey(0)
    kx, kw, kb = jax.random.split(key, 3)

    # Input: (batch, num_segments * window_length) — reshaped inside forward.
    x = jax.random.normal(kx, (batch, num_segments * window_length), jnp.float32)
    # Deterministic synthetic parameters (PyTorch nn.Linear convention).
    weight = jax.random.normal(kw, (hidden_dim, window_length), jnp.float32) * 0.05
    bias = jax.random.normal(kb, (hidden_dim,), jnp.float32) * 0.05

    proj = make_segment_projection(
        weight, bias, num_segments=num_segments, window_length=window_length
    )

    out = jax.block_until_ready(proj(x))
    ref = jnp.maximum(
        x.reshape(-1, num_segments, window_length) @ weight.T + bias, 0.0
    )
    assert out.shape == (batch, num_segments, hidden_dim), out.shape
    # bf16 operands with f32 accumulation -> loose tolerance vs f32 reference.
    assert jnp.allclose(out, ref, atol=2e-2, rtol=2e-2), "mismatch vs reference"

    # Second config exercises the ragged last row-block (grid=2, masked tail).
    batch2 = 9
    x2 = jax.random.normal(kx, (batch2, num_segments * window_length), jnp.float32)
    out2 = jax.block_until_ready(proj(x2))
    ref2 = jnp.maximum(
        x2.reshape(-1, num_segments, window_length) @ weight.T + bias, 0.0
    )
    assert out2.shape == (batch2, num_segments, hidden_dim), out2.shape
    assert jnp.allclose(out2, ref2, atol=2e-2, rtol=2e-2), "mismatch (ragged tail)"

    print("KERNEL_OK")
</pallas_src>

<mosaic_0001>
module attributes {stable_mosaic.version = 11 : i64} {
  func.func @kernel(%arg0: i32, %arg1: memref<8x128xf32, #tpu.memory_space<vmem>>, %arg2: memref<128x256xbf16, #tpu.memory_space<vmem>>, %arg3: memref<1x256xf32, #tpu.memory_space<vmem>>, %arg4: memref<8x256xf32, #tpu.memory_space<vmem>>) attributes {dimension_semantics = [#tpu.dimension_semantics<parallel>], iteration_bounds = array<i64: 1>, scalar_prefetch = 0 : i64, scratch_operands = 0 : i64, tpu.core_type = #tpu.core_type<tc>, window_params = [{transform_indices = @transform_0, window_bounds = array<i64: 8, 128>}, {pipeline_mode = #tpu.pipeline_mode<synchronous>, transform_indices = @transform_1, window_bounds = array<i64: 128, 256>}, {pipeline_mode = #tpu.pipeline_mode<synchronous>, transform_indices = @transform_2, window_bounds = array<i64: 1, 256>}, {transform_indices = @transform_3, window_bounds = array<i64: 8, 256>}]} {
    %c0 = arith.constant 0 : index
    %c0_0 = arith.constant 0 : index
    %0 = vector.load %arg1[%c0, %c0_0] : memref<8x128xf32, #tpu.memory_space<vmem>>, vector<8x128xf32>
    %1 = arith.truncf %0 : vector<8x128xf32> to vector<8x128xbf16>
    %c0_1 = arith.constant 0 : index
    %c0_2 = arith.constant 0 : index
    %2 = vector.load %arg2[%c0_1, %c0_2] : memref<128x256xbf16, #tpu.memory_space<vmem>>, vector<128x256xbf16>
    %cst = arith.constant dense<0.000000e+00> : vector<8x256xf32>
    %3 = tpu.matmul %1, %2, %cst {dimension_numbers = #tpu.dot_dimension_numbers<[1], [0], [0], [1], [0, 0, 1, 1], [], []>} : vector<8x128xbf16>, vector<128x256xbf16>, vector<8x256xf32> -> vector<8x256xf32>
    %c0_3 = arith.constant 0 : index
    %c0_4 = arith.constant 0 : index
    %4 = vector.load %arg3[%c0_3, %c0_4] : memref<1x256xf32, #tpu.memory_space<vmem>>, vector<1x256xf32>
    %5 = vector.broadcast %4 : vector<1x256xf32> to vector<8x256xf32>
    %6 = arith.addf %3, %5 : vector<8x256xf32>
    %cst_5 = arith.constant 0.000000e+00 : f32
    %7 = vector.broadcast %cst_5 : f32 to vector<8x256xf32>
    %8 = arith.maximumf %6, %7 : vector<8x256xf32>
    %c0_6 = arith.constant 0 : index
    %c0_7 = arith.constant 0 : index
    %9 = vector.load %arg4[%c0_6, %c0_7] : memref<8x256xf32, #tpu.memory_space<vmem>>, vector<8x256xf32>
    tpu.vector_store %arg4[%c0_6, %c0_7], %8 {strides = array<i32>} : memref<8x256xf32, #tpu.memory_space<vmem>>, vector<8x256xf32>,
    return
  }
  func.func @transform_0(%arg0: i32) -> (i32, i32) {
    %c0_i32 = arith.constant 0 : i32
    %c0_i32_0 = arith.constant 0 : i32
    return %arg0, %c0_i32 : i32, i32
  }
  func.func @transform_1(%arg0: i32) -> (i32, i32) {
    %c0_i32 = arith.constant 0 : i32
    %c0_i32_0 = arith.constant 0 : i32
    %c0_i32_1 = arith.constant 0 : i32
    return %c0_i32, %c0_i32_0 : i32, i32
  }
  func.func @transform_2(%arg0: i32) -> (i32, i32) {
    %c0_i32 = arith.constant 0 : i32
    %c0_i32_0 = arith.constant 0 : i32
    %c0_i32_1 = arith.constant 0 : i32
    return %c0_i32, %c0_i32_0 : i32, i32
  }
  func.func @transform_3(%arg0: i32) -> (i32, i32) {
    %c0_i32 = arith.constant 0 : i32
    %c0_i32_0 = arith.constant 0 : i32
    return %arg0, %c0_i32 : i32, i32
  }
}

</mosaic_0001>

<llo_original>
// kernel: apply.1
$region0: #{apply.1}
  #allocation0 [shape = 'u32[]', space=smem, size = 0x4, offset = 0x4, fixed_abs, tag = 'smem constant byte address 0x4 - core index']
  #allocation1 [shape = 'u32[144,128]{1,0:T(1,128)}', space=vmem, size = 0x12000, scoped, tag = 'internal scratch']
  %s0 = inlined_call_operand.vmem [shape: f32[8,128], index: 0, kind: input, shape index: {}]
  %s1 = inlined_call_operand.vmem [shape: bf16[128,256], index: 1, kind: input, shape index: {}]
  %s2 = inlined_call_operand.vmem [shape: f32[1,256], index: 2, kind: input, shape index: {}]
  %s3 = inlined_call_operand.vmem [shape: f32[8,256], index: 3, kind: output, shape index: {}]
  %s4 = sld [smem:[#allocation0]]
  $region22: #{apply.1} parent=0
    _
  %s6 = ssub.s32 1, %s4
  %s7 = scalar_select 0, %s6, %s4
  // Predicated region
  $region2: #{apply.1} parent=0 // pred_check
    _
  $region3: #{apply.1} parent=0 // pred_check_branch
    %9 = sbr.rel (0) target = $region5
  $region4: #{apply.1} parent=0 // pred_region
    _
  $region5: #{apply.1} parent=0 // pred_fallthru
    _
  // Predicated region
  $region6: #{apply.1} parent=0 // pred_check
    _
  $region7: #{apply.1} parent=0 // pred_check_branch
    %11 = sbr.rel (0) target = $region9
  $region8: #{apply.1} parent=0 // pred_region
    _
  $region9: #{apply.1} parent=0 // pred_fallthru
    _
  // Predicated region
  $region10: #{apply.1} parent=0 // pred_check
    _
  $region11: #{apply.1} parent=0 // pred_check_branch
    %13 = sbr.rel (0) target = $region13
  $region12: #{apply.1} parent=0 // pred_region
    _
  $region13: #{apply.1} parent=0 // pred_fallthru
    _
  %v15 = vld [vmem:[%s0] sm:$0xff]
  %v16 = vpack.c.bf16 %v15, %v15
  %v17 = vld [vmem:[%s1] sm:$0xff]
  %v18 = vld [vmem:[%s1 + $0x8] sm:$0xff]
  %v19 = vld [vmem:[%s1 + $0x10] sm:$0xff]
  %v20 = vld [vmem:[%s1 + $0x18] sm:$0xff]
  %v21 = vld [vmem:[%s1 + $0x20] sm:$0xff]
  %v22 = vld [vmem:[%s1 + $0x28] sm:$0xff]
  %v23 = vld [vmem:[%s1 + $0x30] sm:$0xff]
  %v24 = vld [vmem:[%s1 + $0x38] sm:$0xff]
  %v25 = vld [vmem:[%s1 + $0x40] sm:$0xff]
  %v26 = vld [vmem:[%s1 + $0x48] sm:$0xff]
  %v27 = vld [vmem:[%s1 + $0x50] sm:$0xff]
  %v28 = vld [vmem:[%s1 + $0x58] sm:$0xff]
  %v29 = vld [vmem:[%s1 + $0x60] sm:$0xff]
  %v30 = vld [vmem:[%s1 + $0x68] sm:$0xff]
  %v31 = vld [vmem:[%s1 + $0x70] sm:$0xff]
  %v32 = vld [vmem:[%s1 + $0x78] sm:$0xff]
  %v33 = vld [vmem:[%s2] sm:$0x3]
  %v35 = vlaneseq
  %v36 = vshrl.u32 %v35, 7
  %v37 = vsub.s32 0, %v36
  %v38 = vrot.slane %v33, %v37
  %v39 = vlaneseq
  %v40 = vshrl.u32 %v39, 7
  %v41 = vsub.s32 1, %v40
  %v42 = vrot.slane %v33, %v41
  %v61 = vunpack.c.l.b16 %v17
  %v62 = vunpack.c.h.b16 %v17
  %v63 = vunpack.c.l.b16 %v18
  %v64 = vunpack.c.h.b16 %v18
  %v65 = vunpack.c.l.b16 %v19
  %v66 = vunpack.c.h.b16 %v19
  %v67 = vunpack.c.l.b16 %v20
  %v68 = vunpack.c.h.b16 %v20
  %v69 = vunpack.c.l.b16 %v21
  %v70 = vunpack.c.h.b16 %v21
  %v71 = vunpack.c.l.b16 %v22
  %v72 = vunpack.c.h.b16 %v22
  %v73 = vunpack.c.l.b16 %v23
  %v74 = vunpack.c.h.b16 %v23
  %v75 = vunpack.c.l.b16 %v24
  %v76 = vunpack.c.h.b16 %v24
  %v77 = vunpack.c.l.b16 %v25
  %v78 = vunpack.c.h.b16 %v25
  %v79 = vunpack.c.l.b16 %v26
  %v80 = vunpack.c.h.b16 %v26
  %v81 = vunpack.c.l.b16 %v27
  %v82 = vunpack.c.h.b16 %v27
  %v83 = vunpack.c.l.b16 %v28
  %v84 = vunpack.c.h.b16 %v28
  %v85 = vunpack.c.l.b16 %v29
  %v86 = vunpack.c.h.b16 %v29
  %v87 = vunpack.c.l.b16 %v30
  %v88 = vunpack.c.h.b16 %v30
  %v89 = vunpack.c.l.b16 %v31
  %v90 = vunpack.c.h.b16 %v31
  %v91 = vunpack.c.l.b16 %v32
  %v92 = vunpack.c.h.b16 %v32
  %v93 = vpack.c.b16 %v63, %v61
  %v94 = vpack.c.b16 %v64, %v62
  %v95 = vpack.c.b16 %v67, %v65
  %v96 = vpack.c.b16 %v68, %v66
  %v97 = vpack.c.b16 %v71, %v69
  %v98 = vpack.c.b16 %v72, %v70
  %v99 = vpack.c.b16 %v75, %v73
  %v100 = vpack.c.b16 %v76, %v74
  %v101 = vpack.c.b16 %v79, %v77
  %v102 = vpack.c.b16 %v80, %v78
  %v103 = vpack.c.b16 %v83, %v81
  %v104 = vpack.c.b16 %v84, %v82
  %v105 = vpack.c.b16 %v87, %v85
  %v106 = vpack.c.b16 %v88, %v86
  %v107 = vpack.c.b16 %v91, %v89
  %v108 = vpack.c.b16 %v92, %v90
  %125 = vmatprep.subr.bf16.mxu0 %v94
  %126 = vmatpush1.bf16.msra.mxu0 %v93
  %127 = vmatprep.subr.bf16.mxu0 %v96
  %128 = vmatpush1.bf16.msra.mxu0 %v95
  %129 = vmatprep.subr.bf16.mxu0 %v98
  %130 = vmatpush1.bf16.msra.mxu0 %v97
  %131 = vmatprep.subr.bf16.mxu0 %v100
  %132 = vmatpush1.bf16.msra.mxu0 %v99
  %133 = vmatprep.subr.bf16.mxu0 %v102
  %134 = vmatpush1.bf16.msra.mxu0 %v101
  %135 = vmatprep.subr.bf16.mxu0 %v104
  %136 = vmatpush1.bf16.msra.mxu0 %v103
  %137 = vmatprep.subr.bf16.mxu0 %v106
  %138 = vmatpush1.bf16.msra.mxu0 %v105
  %139 = vmatprep.subr.bf16.mxu0 %v108
  %140 = vmatpush1.bf16.msra.mxu0 %v107
  %141 = vmatprep.subr.bf16.mxu0 0
  %142 = vmatpush1.bf16.msra.mxu0 0
  %143 = vmatprep.subr.bf16.mxu0 0
  %144 = vmatpush1.bf16.msra.mxu0 0
  %145 = vmatprep.subr.bf16.mxu0 0
  %146 = vmatpush1.bf16.msra.mxu0 0
  %147 = vmatprep.subr.bf16.mxu0 0
  %148 = vmatpush1.bf16.msra.mxu0 0
  %149 = vmatprep.subr.bf16.mxu0 0
  %150 = vmatpush1.bf16.msra.mxu0 0
  %151 = vmatprep.subr.bf16.mxu0 0
  %152 = vmatpush1.bf16.msra.mxu0 0
  %153 = vmatprep.subr.bf16.mxu0 0
  %154 = vmatpush1.bf16.msra.mxu0 0
  %155 = vmatprep.subr.bf16.mxu0 0
  %156 = vmatpush1.bf16.msra.mxu0 0
  %157 = vmatprep.mubr.bf16.mxu0 0
  %158 = vmatmul.mubr.bf16.gmra.mrb[0].mxu0 %v16
  %v159 = vpop.f32.mrb[0].mxu0
  %v160 = vadd.f32 %v38, %v159
  %v161 = vpop.f32.mrb[0].mxu0
  %v162 = vadd.f32 %v42, %v161
  %v163 = vpop.f32.mrb[0].mxu0
  %v164 = vpop.f32.mrb[0].mxu0
  %165 = vdwg.mxu0
  %v166 = vmax.f32 %v160, 0.0
  %v167 = vmax.f32 %v162, 0.0
  %168 = vst [vmem:[%s3] sm:$0xff] %v166
  %169 = vst [vmem:[%s3 + $0x8] sm:$0xff] %v167
  // Predicated region
  $region14: #{apply.1} parent=0 // pred_check
    _
  $region15: #{apply.1} parent=0 // pred_check_branch
    %171 = sbr.rel (0) target = $region17
  $region16: #{apply.1} parent=0 // pred_region
    _
  $region17: #{apply.1} parent=0 // pred_fallthru
    _
  // Predicated region
  $region18: #{apply.1} parent=0 // pred_check
    _
  $region19: #{apply.1} parent=0 // pred_check_branch
    %173 = sbr.rel (0) target = $region21
  $region20: #{apply.1} parent=0 // pred_region
    _
  $region21: #{apply.1} parent=0 // pred_fallthru
    _

</llo_original>
